<compile_context>
chip_gen: v7x
topology: tpu7x:2x2x1
jax: 0.10.0
libtpu: 0.0.40
codegen_flags: <defaults>
</compile_context>

<pallas_src>
import functools

import jax
import jax.numpy as jnp
from jax import lax
from jax.experimental import pallas as pl
from jax.experimental.pallas import tpu as pltpu


def _lsce_kernel(x_ref, t_ref, o_ref, *, a, b, total_rows):
    i = pl.program_id(0)

    x = x_ref[...].astype(jnp.float32)          # (tm, C)
    t = t_ref[...]                              # (tm, 1) int32
    tm, _ = x.shape

    # Numerically stable log-sum-exp along the class (lane) axis.
    m = jnp.max(x, axis=-1, keepdims=True)                              # (tm, 1)
    lse = m + jnp.log(jnp.sum(jnp.exp(x - m), axis=-1, keepdims=True))  # (tm, 1)

    # Fused weighted reduce: w_rc = a + b*[c == t_r]   (sum_c w_rc == 1).
    col = lax.broadcasted_iota(jnp.int32, x.shape, 1)
    w = a + b * (col == t).astype(jnp.float32)
    wx = jnp.sum(w * x, axis=-1, keepdims=True)                         # (tm, 1)

    loss_row = lse - wx                                                 # (tm, 1)

    # Mask rows of a ragged last tile that fall past the real batch size.
    # Keep this a select (not a multiply): padded rows can contain NaN/Inf.
    row = i * tm + lax.broadcasted_iota(jnp.int32, (tm, 1), 0)
    loss_row = jnp.where(row < total_rows, loss_row, 0.0)

    # Per-tile partial sum -> this step's own (1, 1, 1) output block.
    o_ref[...] = jnp.sum(loss_row, axis=0, keepdims=True).reshape(1, 1, 1)


def _round_up(v, m):
    return ((v + m - 1) // m) * m


def _padded_row_bytes(n_classes, itemsize):
    """Per-row padded VMEM/HBM bytes of one pipeline buffer (logits, target)."""
    logits_row = _round_up(max(n_classes, 1), 128) * itemsize
    target_row = 128 * 4            # (tm, 1) int32 block pads to 128 lanes
    return logits_row, target_row


def _pick_tile_rows(n_rows, n_classes, itemsize, tile_budget_bytes):
    """As many rows as fit the padded per-buffer budget; multiple of 8
    (multiple of 128 when large, to keep a lane-dense-target upgrade easy)."""
    logits_row, target_row = _padded_row_bytes(n_classes, itemsize)
    tm = tile_budget_bytes // (logits_row + target_row)
    tm = (tm // 128) * 128 if tm >= 128 else max(8, (tm // 8) * 8)
    tm = min(tm, _round_up(n_rows, 8))      # never larger than padded batch
    return max(8, tm)


def _vmem_limit_bytes(tm, n_classes, itemsize):
    """Scoped-VMEM request: double-buffered inputs + headroom for Mosaic's
    full-block f32 temporaries, clamped to [16 MiB, 40 MiB] (v7x-safe)."""
    logits_row, target_row = _padded_row_bytes(n_classes, itemsize)
    inputs_db = 2 * tm * (logits_row + target_row)
    f32_block = tm * _round_up(max(n_classes, 1), 128) * 4
    limit = inputs_db + 6 * f32_block + (2 << 20)
    return int(min(max(limit, 16 << 20), 40 << 20))


def label_smoothing_cross_entropy(x, target, smoothing=0.1, tm=None,
                                  tile_budget_bytes=4 << 20):
    """x: (N, C) float logits; target: (N,) int class indices -> scalar mean loss."""
    N, C = x.shape
    itemsize = jnp.dtype(x.dtype).itemsize
    if tm is None:
        tm = _pick_tile_rows(N, C, itemsize, tile_budget_bytes)
    tm = max(8, (tm // 8) * 8)
    num_tiles = (N + tm - 1) // tm

    a = smoothing / (C - 1.0) if C > 1 else 0.0     # off-target weight
    b = 1.0 - smoothing - a                         # extra weight on target

    t2 = target.astype(jnp.int32).reshape(N, 1)
    kernel = functools.partial(_lsce_kernel, a=float(a), b=float(b), total_rows=N)

    cost = pl.CostEstimate(
        flops=int(5 * N * C),
        transcendentals=int(N * C + N),
        bytes_accessed=int(N * C * itemsize + N * 4 + num_tiles * 4),
    )

    partials = pl.pallas_call(
        kernel,
        out_shape=jax.ShapeDtypeStruct((num_tiles, 1, 1), jnp.float32),
        grid_spec=pltpu.PrefetchScalarGridSpec(
            num_scalar_prefetch=0,
            grid=(num_tiles,),
            in_specs=[
                pl.BlockSpec((tm, C), lambda i: (i, 0)),   # logits row tile
                pl.BlockSpec((tm, 1), lambda i: (i, 0)),   # target row tile
            ],
            out_specs=pl.BlockSpec((1, 1, 1), lambda i: (i, 0, 0)),
        ),
        compiler_params=pltpu.CompilerParams(
            # Independent tiles: shardable across both TensorCores on v7x.
            dimension_semantics=("parallel",),
            vmem_limit_bytes=_vmem_limit_bytes(tm, C, itemsize),
        ),
        cost_estimate=cost,
    )(x, t2)

    return jnp.sum(partials) / jnp.float32(N)


def _reference(x, target, smoothing=0.1):
    log_prob = jax.nn.log_softmax(x.astype(jnp.float32), axis=-1)
    C = x.shape[-1]
    w = jnp.full(x.shape, smoothing / (C - 1.0), jnp.float32)
    one_hot = jax.nn.one_hot(target, C, dtype=jnp.float32)
    w = w * (1.0 - one_hot) + one_hot * (1.0 - smoothing)
    return jnp.mean(jnp.sum(-w * log_prob, axis=-1))


if __name__ == "__main__":
    key = jax.random.PRNGKey(0)
    k1, k2, k3, k4, k5, k6 = jax.random.split(key, 6)

    # 1) Small single-tile shape consistent with the module (batch=16, C=32).
    N, C = 16, 32
    x = jax.random.normal(k1, (N, C), dtype=jnp.float32)
    t = jax.random.randint(k2, (N,), 0, C, dtype=jnp.int32)
    loss = jax.block_until_ready(label_smoothing_cross_entropy(x, t, smoothing=0.1))
    ref = _reference(x, t, smoothing=0.1)
    assert jnp.allclose(loss, ref, rtol=1e-5, atol=1e-4), (loss, ref)

    # 2) Multi-tile + ragged last tile (N % tm != 0).
    N2, C2 = 36, 32
    x2 = jax.random.normal(k3, (N2, C2), dtype=jnp.float32)
    t2 = jax.random.randint(k4, (N2,), 0, C2, dtype=jnp.int32)
    loss2 = jax.block_until_ready(
        label_smoothing_cross_entropy(x2, t2, smoothing=0.1, tm=16))
    ref2 = _reference(x2, t2, smoothing=0.1)
    assert jnp.allclose(loss2, ref2, rtol=1e-5, atol=1e-4), (loss2, ref2)

    # 3) Default budget-driven tiling: large row tile, non-128-multiple C,
    #    ragged last tile.
    N3, C3 = 2048, 1000
    x3 = jax.random.normal(k5, (N3, C3), dtype=jnp.float32)
    t3 = jax.random.randint(k6, (N3,), 0, C3, dtype=jnp.int32)
    loss3 = jax.block_until_ready(
        label_smoothing_cross_entropy(x3, t3, smoothing=0.1))
    ref3 = _reference(x3, t3, smoothing=0.1)
    assert jnp.allclose(loss3, ref3, rtol=1e-5, atol=1e-4), (loss3, ref3)

    print("KERNEL_OK")
</pallas_src>

<mosaic_0001>
module attributes {stable_mosaic.version = 11 : i64} {
  func.func @_lsce_kernel(%arg0: i32, %arg1: memref<16x32xf32, #tpu.memory_space<vmem>>, %arg2: memref<16x1xi32, #tpu.memory_space<vmem>>, %arg3: memref<1x1x1xf32, #tpu.memory_space<vmem>>) attributes {dimension_semantics = [#tpu.dimension_semantics<parallel>], iteration_bounds = array<i64: 1>, scalar_prefetch = 0 : i64, scratch_operands = 0 : i64, tpu.core_type = #tpu.core_type<tc>, window_params = [{transform_indices = @transform_0, window_bounds = array<i64: 16, 32>}, {transform_indices = @transform_1, window_bounds = array<i64: 16, 1>}, {transform_indices = @transform_2, window_bounds = array<i64: 1, 1, 1>}]} {
    %c0 = arith.constant 0 : index
    %c0_0 = arith.constant 0 : index
    %0 = vector.load %arg1[%c0, %c0_0] : memref<16x32xf32, #tpu.memory_space<vmem>>, vector<16x32xf32>
    %c0_1 = arith.constant 0 : index
    %c0_2 = arith.constant 0 : index
    %1 = vector.load %arg2[%c0_1, %c0_2] : memref<16x1xi32, #tpu.memory_space<vmem>>, vector<16x1xi32>
    %cst = arith.constant dense<0xFF800000> : vector<16xf32>
    %2 = vector.multi_reduction <maximumf>, %0, %cst [1] : vector<16x32xf32> to vector<16xf32>
    %3 = vector.shape_cast %2 : vector<16xf32> to vector<16x1xf32>
    %4 = vector.broadcast %3 : vector<16x1xf32> to vector<16x32xf32>
    %5 = arith.subf %0, %4 : vector<16x32xf32>
    %6 = math.exp %5 : vector<16x32xf32>
    %cst_3 = arith.constant dense<0.000000e+00> : vector<16xf32>
    %7 = vector.multi_reduction <add>, %6, %cst_3 [1] : vector<16x32xf32> to vector<16xf32>
    %8 = vector.shape_cast %7 : vector<16xf32> to vector<16x1xf32>
    %9 = math.log %8 : vector<16x1xf32>
    %10 = arith.addf %3, %9 : vector<16x1xf32>
    %11 = tpu.iota {dimensions = array<i32: 1>} : vector<16x32xi32>
    %12 = vector.broadcast %1 : vector<16x1xi32> to vector<16x32xi32>
    %13 = arith.cmpi eq, %11, %12 : vector<16x32xi32>
    %14 = arith.extui %13 : vector<16x32xi1> to vector<16x32xi32>
    %15 = arith.sitofp %14 : vector<16x32xi32> to vector<16x32xf32>
    %cst_4 = arith.constant 0.896774172 : f32
    %16 = vector.broadcast %cst_4 : f32 to vector<16x32xf32>
    %17 = arith.mulf %16, %15 : vector<16x32xf32>
    %cst_5 = arith.constant 0.0032258064 : f32
    %18 = vector.broadcast %cst_5 : f32 to vector<16x32xf32>
    %19 = arith.addf %18, %17 : vector<16x32xf32>
    %20 = arith.mulf %19, %0 : vector<16x32xf32>
    %cst_6 = arith.constant dense<0.000000e+00> : vector<16xf32>
    %21 = vector.multi_reduction <add>, %20, %cst_6 [1] : vector<16x32xf32> to vector<16xf32>
    %22 = vector.shape_cast %21 : vector<16xf32> to vector<16x1xf32>
    %23 = arith.subf %10, %22 : vector<16x1xf32>
    %c16_i32 = arith.constant 16 : i32
    %24 = arith.muli %arg0, %c16_i32 : i32
    %25 = tpu.iota {dimensions = array<i32: 0>} : vector<16x1xi32>
    %26 = vector.broadcast %24 : i32 to vector<16x1xi32>
    %27 = arith.addi %26, %25 : vector<16x1xi32>
    %c16_i32_7 = arith.constant 16 : i32
    %28 = vector.broadcast %c16_i32_7 : i32 to vector<16x1xi32>
    %29 = arith.cmpi slt, %27, %28 : vector<16x1xi32>
    %cst_8 = arith.constant 0.000000e+00 : f32
    %30 = vector.broadcast %cst_8 : f32 to vector<16x1xf32>
    %31 = arith.select %29, %23, %30 : vector<16x1xi1>, vector<16x1xf32>
    %cst_9 = arith.constant dense<0.000000e+00> : vector<1xf32>
    %32 = vector.multi_reduction <add>, %31, %cst_9 [0] : vector<16x1xf32> to vector<1xf32>
    %33 = vector.shape_cast %32 : vector<1xf32> to vector<1x1xf32>
    %34 = vector.shape_cast %33 : vector<1x1xf32> to vector<1x1x1xf32>
    %c0_10 = arith.constant 0 : index
    %c0_11 = arith.constant 0 : index
    %c0_12 = arith.constant 0 : index
    %35 = vector.load %arg3[%c0_10, %c0_11, %c0_12] : memref<1x1x1xf32, #tpu.memory_space<vmem>>, vector<1x1x1xf32>
    tpu.vector_store %arg3[%c0_10, %c0_11, %c0_12], %34 {strides = array<i32>} : memref<1x1x1xf32, #tpu.memory_space<vmem>>, vector<1x1x1xf32>,
    return
  }
  func.func @transform_0(%arg0: i32) -> (i32, i32) {
    %c0_i32 = arith.constant 0 : i32
    %c0_i32_0 = arith.constant 0 : i32
    return %arg0, %c0_i32 : i32, i32
  }
  func.func @transform_1(%arg0: i32) -> (i32, i32) {
    %c0_i32 = arith.constant 0 : i32
    %c0_i32_0 = arith.constant 0 : i32
    return %arg0, %c0_i32 : i32, i32
  }
  func.func @transform_2(%arg0: i32) -> (i32, i32, i32) {
    %c0_i32 = arith.constant 0 : i32
    %c0_i32_0 = arith.constant 0 : i32
    %c0_i32_1 = arith.constant 0 : i32
    return %arg0, %c0_i32, %c0_i32_0 : i32, i32, i32
  }
}

</mosaic_0001>

<llo_original>
// kernel: tpu_custom_call.1
$region0: #{tpu_custom_call.1}
  #allocation0 [shape = 'u32[]', space=smem, size = 0x4, offset = 0x4, fixed_abs, tag = 'smem constant byte address 0x4 - core index']
  #allocation1 [shape = 'u32[144,128]{1,0:T(1,128)}', space=vmem, size = 0x12000, scoped, tag = 'internal scratch']
  %s0 = inlined_call_operand.vmem [shape: f32[16,32], index: 0, kind: input, shape index: {}]
  %s1 = inlined_call_operand.vmem [shape: s32[16,1], index: 1, kind: input, shape index: {}]
  %s2 = inlined_call_operand.hbm [shape: f32[1,1,1], index: 2, kind: output, shape index: {}]
  %s3 = sld [smem:[#allocation0]]
  $region18: #{tpu_custom_call.1} parent=0
    _
  %s5 = ssub.s32 1, %s3
  %s6 = scalar_select 0, %s5, %s3
  $region1: #{tpu_custom_call.1} parent=0
    #allocation2 [shape = 'u8[512]{0}', space=vmem, size = 0x400, scoped, tag = 'output window, operand 0, single buffered']
    #allocation3 [shape = 's32[1]{0}', space=sflag, size = 0x4, scoped, tag = 'scoped memory for tpu_custom_call.1']
    %7 = vsyncpa [#allocation3], 0
    // Predicated region
    $region2: #{tpu_custom_call.1} parent=1 // pred_check
      _
    $region3: #{tpu_custom_call.1} parent=1 // pred_check_branch
      %9 = sbr.rel (0) target = $region5
    $region4: #{tpu_custom_call.1} parent=1 // pred_region
      _
    $region5: #{tpu_custom_call.1} parent=1 // pred_fallthru
      _
    // Predicated region
    $region6: #{tpu_custom_call.1} parent=1 // pred_check
      _
    $region7: #{tpu_custom_call.1} parent=1 // pred_check_branch
      %11 = sbr.rel (0) target = $region9
    $region8: #{tpu_custom_call.1} parent=1 // pred_region
      _
    $region9: #{tpu_custom_call.1} parent=1 // pred_fallthru
      _
    %v12 = vld [vmem:[%s0] sm:$0xff]
    %v13 = vld [vmem:[%s0 + $0x8] sm:$0xff]
    %v14 = vld [vmem:[%s1] sm:$0xff]
    %v15 = vld [vmem:[%s1 + $0x8] sm:$0xff]
    %vm16 = vcmask 261120
    %v17 = vsel %vm16, %v12, -inf
    %18 = vmax.xlane.f32.xlu0 %v17
    %v19 = vpop.xlane.xlu0 %18
    %v20 = vsel %vm16, %v13, -inf
    %21 = vmax.xlane.f32.xlu0 %v20
    %v22 = vpop.xlane.xlu0 %21
    %v23 = vsub.f32 %v12, %v19
    %v24 = vsub.f32 %v13, %v22
    %v25 = vmul.f32 %v23, 1.442695
    %v26 = vpow.pop %v25
    %v27 = vmul.f32 %v24, 1.442695
    %v28 = vpow.pop %v27
    %v29 = vsel %vm16, %v26, 0.0
    %30 = vadd.xlane.f32.xlu0 %v29
    %v31 = vpop.xlane.xlu0 %30
    %v32 = vsel %vm16, %v28, 0.0
    %33 = vadd.xlane.f32.xlu0 %v32
    %v34 = vpop.xlane.xlu0 %33
    %v35 = vlog2.pop %v31
    %v36 = vmul.f32 %v35, 0.6931472
    %v37 = vlog2.pop %v34
    %v38 = vmul.f32 %v37, 0.6931472
    %v39 = vadd.f32 %v19, %v36
    %v40 = vadd.f32 %v22, %v38
    %v41 = vlaneseq
    %v42 = vand.u32 %v41, 127
    %43 = vset.pattern.permute.xlu0 0
    %44 = vperm.xlu0 %43, %v14
    %v45 = vpop.permute.xlu0 %44
    %46 = vset.pattern.permute.xlu0 0
    %47 = vperm.xlu0 %46, %v15
    %v48 = vpop.permute.xlu0 %47
    %vm49 = vcmp.eq.s32.totalorder %v42, %v45
    %vm50 = vcmp.eq.s32.totalorder %v42, %v48
    %v51 = vsel %vm49, 1, 0
    %v52 = vsel %vm50, 1, 0
    %v53 = vcvt.s32.f32 %v51
    %v54 = vcvt.s32.f32 %v52
    %v55 = vmul.f32 %v53, 0.8967742
    %v56 = vmul.f32 %v54, 0.8967742
    %v57 = vadd.f32 %v55, 0.0032258064
    %v58 = vadd.f32 %v56, 0.0032258064
    %v59 = vmul.f32 %v57, %v12
    %v60 = vmul.f32 %v58, %v13
    %v61 = vsel %vm16, %v59, 0.0
    %62 = vadd.xlane.f32.xlu0 %v61
    %v63 = vpop.xlane.xlu0 %62
    %v64 = vsel %vm16, %v60, 0.0
    %65 = vadd.xlane.f32.xlu0 %v64
    %v66 = vpop.xlane.xlu0 %65
    %v67 = vsub.f32 %v39, %v63
    %v68 = vsub.f32 %v40, %v66
    %s69 = smul.u32 0, 16
    %v70 = vlaneseq
    %v71 = vshrl.u32 %v70, 7
    %v72 = vadd.s32 %v71, 8
    %v73 = vstv %s69
    %v74 = vadd.s32 %v73, %v71
    %v75 = vadd.s32 %v73, %v72
    %vm76 = vcmp.lt.s32.totalorder %v74, 16
    %vm77 = vcmp.lt.s32.totalorder %v75, 16
    %v78 = vsel %vm76, %v67, 0.0
    %v79 = vsel %vm77, %v68, 0.0
    %v80 = vadd.f32 %v78, %v79
    %v81 = vrot.slane %v80, 4
    %v82 = vadd.f32 %v80, %v81
    %v83 = vrot.slane %v82, 2
    %v84 = vadd.f32 %v82, %v83
    %v85 = vrot.slane %v84, 1
    %v86 = vadd.f32 %v84, %v85
    %vm87 = vcmask 0
    %88 = vst.msk [vmem:[#allocation2] sm:$0x1] %vm87, %v86
    // Predicated region
    $region10: #{tpu_custom_call.1} parent=1 // pred_check
      _
    $region11: #{tpu_custom_call.1} parent=1 // pred_check_branch
      %90 = sbr.rel (0) target = $region13
    $region12: #{tpu_custom_call.1} parent=1 // pred_region
      %s92 = ssub.s32 16, 16
      %93 = vsyncadd [#allocation3], %s92
      %s95 = sshll.u32 [#allocation2], 4
      %s96 = int_to_ptr.vmem [resolvable:$true] %s95
      %98 = dma.vmem_to_hbm [thread:$0]  %s96, 16, %s2, [#allocation3]
    $region13: #{tpu_custom_call.1} parent=1 // pred_fallthru
      _
    // Predicated region
    $region14: #{tpu_custom_call.1} parent=1 // pred_check
      _
    $region15: #{tpu_custom_call.1} parent=1 // pred_check_branch
      %100 = sbr.rel (0) target = $region17
    $region16: #{tpu_custom_call.1} parent=1 // pred_region
      %101 = dma.done [#allocation3], 16
    $region17: #{tpu_custom_call.1} parent=1 // pred_fallthru
      _
    %102 = vsyncpa [#allocation3], 1

</llo_original>
